<compile_context>
chip_gen: v6e
topology: v6e:2x2x1
jax: 0.10.0
libtpu: 0.0.40
codegen_flags: <defaults>
</compile_context>

<pallas_src>
import jax
import jax.numpy as jnp
from jax.experimental import pallas as pl
from jax.experimental.pallas import tpu as pltpu


def _middle_model_kernel(x_ref,                      # (tb, C)      f32
                         w1_ref, b1_ref,             # (C, 64), (1, 64)
                         w2_ref, b2_ref,             # (64, 64), (1, 64)
                         w3_ref, b3_ref,             # (64, 64), (1, 64)
                         w4_ref, b4_ref,             # (64, H_out), (1, H_out)
                         wr_ref, br_ref,             # (H_out, 1), (1, 1)
                         h_ref,                      # (tb, H_out)  f32
                         r_ref):                     # (tb, 1)      f32
    x = x_ref[...]
    # Layer 1..4: Linear + ReLU, all on full tiles (MXU matmul + VPU max).
    h = jnp.maximum(
        jnp.dot(x, w1_ref[...], preferred_element_type=jnp.float32) + b1_ref[...], 0.0)
    h = jnp.maximum(
        jnp.dot(h, w2_ref[...], preferred_element_type=jnp.float32) + b2_ref[...], 0.0)
    h = jnp.maximum(
        jnp.dot(h, w3_ref[...], preferred_element_type=jnp.float32) + b3_ref[...], 0.0)
    h = jnp.maximum(
        jnp.dot(h, w4_ref[...], preferred_element_type=jnp.float32) + b4_ref[...], 0.0)
    h_ref[...] = h.astype(h_ref.dtype)
    # Regression head on the fused hidden state (no extra HBM pass over h).
    r_ref[...] = (jnp.dot(h, wr_ref[...], preferred_element_type=jnp.float32)
                  + br_ref[...]).astype(r_ref.dtype)


def middle_model_forward(x, params, *, batch_tile=128):
    """x: (B, in_channels) f32. Returns (h: (B, output_size), r: (B, 1))."""
    B, C = x.shape
    H_out = params["w4"].shape[1]

    tb = min(batch_tile, B)
    # Pad the batch to a full tile so every block is dense (cheap; sliced off below).
    n_tiles = pl.cdiv(B, tb)
    Bp = n_tiles * tb
    if Bp != B:
        x = jnp.pad(x, ((0, Bp - B), (0, 0)))

    vmem_full = pl.BlockSpec(memory_space=pltpu.MemorySpace.VMEM)  # whole array in VMEM

    kernel = pl.pallas_call(
        _middle_model_kernel,
        grid=(n_tiles,),
        in_specs=[pl.BlockSpec((tb, C), lambda i: (i, 0))] + [vmem_full] * 10,
        out_specs=[pl.BlockSpec((tb, H_out), lambda i: (i, 0)),
                   pl.BlockSpec((tb, 1), lambda i: (i, 0))],
        out_shape=[jax.ShapeDtypeStruct((Bp, H_out), jnp.float32),
                   jax.ShapeDtypeStruct((Bp, 1), jnp.float32)],
        compiler_params=pltpu.CompilerParams(
            dimension_semantics=("parallel",)),     # batch tiles are independent (v7x megacore)
    )
    h, r = kernel(
        x,
        params["w1"], params["b1"],
        params["w2"], params["b2"],
        params["w3"], params["b3"],
        params["w4"], params["b4"],
        params["wr"], params["br"],
    )
    return h[:B], r[:B]


def init_params(key, in_channels, output_size):
    """Deterministic synthetic parameters matching the PyTorch module's Linear layers.

    PyTorch stores Linear.weight as (out, in); here weights are pre-transposed to
    (in, out) and biases stored as (1, out) so the kernel does plain row-major matmuls.
    (If loading a real checkpoint, transpose weight and reshape bias accordingly.)
    """
    dims = [(in_channels, 64), (64, 64), (64, 64), (64, output_size), (output_size, 1)]
    names = ["1", "2", "3", "4", "r"]
    keys = jax.random.split(key, 2 * len(dims))
    params = {}
    for idx, ((din, dout), name) in enumerate(zip(dims, names)):
        bound = 1.0 / jnp.sqrt(jnp.float32(din))
        params[f"w{name}"] = jax.random.uniform(
            keys[2 * idx], (din, dout), jnp.float32, minval=-bound, maxval=bound)
        params[f"b{name}"] = jax.random.uniform(
            keys[2 * idx + 1], (1, dout), jnp.float32, minval=-bound, maxval=bound)
    return params


def middle_model_ref(x, params):
    """Pure-JAX reference for correctness checking."""
    h = x
    for name in ["1", "2", "3", "4"]:
        h = jnp.maximum(h @ params[f"w{name}"] + params[f"b{name}"], 0.0)
    r = h @ params["wr"] + params["br"]
    return h, r


if __name__ == "__main__":
    B = 8                 # sublane-aligned small batch (feedback: avoid B=2 vreg waste)
    in_channels = 32
    output_size = 32

    key = jax.random.PRNGKey(0)
    k_x, k_p = jax.random.split(key)
    x = jax.random.normal(k_x, (B, in_channels), jnp.float32)
    params = init_params(k_p, in_channels, output_size)

    h, r = middle_model_forward(x, params)
    h = jax.block_until_ready(h)
    r = jax.block_until_ready(r)

    assert h.shape == (B, output_size), h.shape
    assert r.shape == (B, 1), r.shape

    h_ref, r_ref = middle_model_ref(x, params)
    assert jnp.allclose(h, h_ref, atol=1e-5, rtol=1e-5), float(jnp.max(jnp.abs(h - h_ref)))
    assert jnp.allclose(r, r_ref, atol=1e-5, rtol=1e-5), float(jnp.max(jnp.abs(r - r_ref)))

    print("KERNEL_OK")
</pallas_src>

<mosaic_0001>
module attributes {stable_mosaic.version = 11 : i64} {
  func.func @_middle_model_kernel(%arg0: i32, %arg1: memref<8x32xf32, #tpu.memory_space<vmem>>, %arg2: memref<32x64xf32, #tpu.memory_space<vmem>>, %arg3: memref<1x64xf32, #tpu.memory_space<vmem>>, %arg4: memref<64x64xf32, #tpu.memory_space<vmem>>, %arg5: memref<1x64xf32, #tpu.memory_space<vmem>>, %arg6: memref<64x64xf32, #tpu.memory_space<vmem>>, %arg7: memref<1x64xf32, #tpu.memory_space<vmem>>, %arg8: memref<64x32xf32, #tpu.memory_space<vmem>>, %arg9: memref<1x32xf32, #tpu.memory_space<vmem>>, %arg10: memref<32x1xf32, #tpu.memory_space<vmem>>, %arg11: memref<1x1xf32, #tpu.memory_space<vmem>>, %arg12: memref<8x32xf32, #tpu.memory_space<vmem>>, %arg13: memref<8x1xf32, #tpu.memory_space<vmem>>) attributes {dimension_semantics = [#tpu.dimension_semantics<parallel>], iteration_bounds = array<i64: 1>, scalar_prefetch = 0 : i64, scratch_operands = 0 : i64, tpu.core_type = #tpu.core_type<tc>, window_params = [{transform_indices = @transform_0, window_bounds = array<i64: 8, 32>}, {pipeline_mode = #tpu.pipeline_mode<synchronous>, transform_indices = @transform_1, window_bounds = array<i64: 32, 64>}, {pipeline_mode = #tpu.pipeline_mode<synchronous>, transform_indices = @transform_2, window_bounds = array<i64: 1, 64>}, {pipeline_mode = #tpu.pipeline_mode<synchronous>, transform_indices = @transform_3, window_bounds = array<i64: 64, 64>}, {pipeline_mode = #tpu.pipeline_mode<synchronous>, transform_indices = @transform_4, window_bounds = array<i64: 1, 64>}, {pipeline_mode = #tpu.pipeline_mode<synchronous>, transform_indices = @transform_5, window_bounds = array<i64: 64, 64>}, {pipeline_mode = #tpu.pipeline_mode<synchronous>, transform_indices = @transform_6, window_bounds = array<i64: 1, 64>}, {pipeline_mode = #tpu.pipeline_mode<synchronous>, transform_indices = @transform_7, window_bounds = array<i64: 64, 32>}, {pipeline_mode = #tpu.pipeline_mode<synchronous>, transform_indices = @transform_8, window_bounds = array<i64: 1, 32>}, {pipeline_mode = #tpu.pipeline_mode<synchronous>, transform_indices = @transform_9, window_bounds = array<i64: 32, 1>}, {pipeline_mode = #tpu.pipeline_mode<synchronous>, transform_indices = @transform_10, window_bounds = array<i64: 1, 1>}, {transform_indices = @transform_11, window_bounds = array<i64: 8, 32>}, {transform_indices = @transform_12, window_bounds = array<i64: 8, 1>}]} {
    %c0 = arith.constant 0 : index
    %c0_0 = arith.constant 0 : index
    %0 = vector.load %arg1[%c0, %c0_0] : memref<8x32xf32, #tpu.memory_space<vmem>>, vector<8x32xf32>
    %c0_1 = arith.constant 0 : index
    %c0_2 = arith.constant 0 : index
    %1 = vector.load %arg2[%c0_1, %c0_2] : memref<32x64xf32, #tpu.memory_space<vmem>>, vector<32x64xf32>
    %cst = arith.constant dense<0.000000e+00> : vector<8x64xf32>
    %2 = tpu.matmul %0, %1, %cst {dimension_numbers = #tpu.dot_dimension_numbers<[1], [0], [0], [1], [0, 0, 1, 1], [], []>} : vector<8x32xf32>, vector<32x64xf32>, vector<8x64xf32> -> vector<8x64xf32>
    %c0_3 = arith.constant 0 : index
    %c0_4 = arith.constant 0 : index
    %3 = vector.load %arg3[%c0_3, %c0_4] : memref<1x64xf32, #tpu.memory_space<vmem>>, vector<1x64xf32>
    %4 = vector.broadcast %3 : vector<1x64xf32> to vector<8x64xf32>
    %5 = arith.addf %2, %4 : vector<8x64xf32>
    %cst_5 = arith.constant 0.000000e+00 : f32
    %6 = vector.broadcast %cst_5 : f32 to vector<8x64xf32>
    %7 = arith.maximumf %5, %6 : vector<8x64xf32>
    %c0_6 = arith.constant 0 : index
    %c0_7 = arith.constant 0 : index
    %8 = vector.load %arg4[%c0_6, %c0_7] : memref<64x64xf32, #tpu.memory_space<vmem>>, vector<64x64xf32>
    %cst_8 = arith.constant dense<0.000000e+00> : vector<8x64xf32>
    %9 = tpu.matmul %7, %8, %cst_8 {dimension_numbers = #tpu.dot_dimension_numbers<[1], [0], [0], [1], [0, 0, 1, 1], [], []>} : vector<8x64xf32>, vector<64x64xf32>, vector<8x64xf32> -> vector<8x64xf32>
    %c0_9 = arith.constant 0 : index
    %c0_10 = arith.constant 0 : index
    %10 = vector.load %arg5[%c0_9, %c0_10] : memref<1x64xf32, #tpu.memory_space<vmem>>, vector<1x64xf32>
    %11 = vector.broadcast %10 : vector<1x64xf32> to vector<8x64xf32>
    %12 = arith.addf %9, %11 : vector<8x64xf32>
    %cst_11 = arith.constant 0.000000e+00 : f32
    %13 = vector.broadcast %cst_11 : f32 to vector<8x64xf32>
    %14 = arith.maximumf %12, %13 : vector<8x64xf32>
    %c0_12 = arith.constant 0 : index
    %c0_13 = arith.constant 0 : index
    %15 = vector.load %arg6[%c0_12, %c0_13] : memref<64x64xf32, #tpu.memory_space<vmem>>, vector<64x64xf32>
    %cst_14 = arith.constant dense<0.000000e+00> : vector<8x64xf32>
    %16 = tpu.matmul %14, %15, %cst_14 {dimension_numbers = #tpu.dot_dimension_numbers<[1], [0], [0], [1], [0, 0, 1, 1], [], []>} : vector<8x64xf32>, vector<64x64xf32>, vector<8x64xf32> -> vector<8x64xf32>
    %c0_15 = arith.constant 0 : index
    %c0_16 = arith.constant 0 : index
    %17 = vector.load %arg7[%c0_15, %c0_16] : memref<1x64xf32, #tpu.memory_space<vmem>>, vector<1x64xf32>
    %18 = vector.broadcast %17 : vector<1x64xf32> to vector<8x64xf32>
    %19 = arith.addf %16, %18 : vector<8x64xf32>
    %cst_17 = arith.constant 0.000000e+00 : f32
    %20 = vector.broadcast %cst_17 : f32 to vector<8x64xf32>
    %21 = arith.maximumf %19, %20 : vector<8x64xf32>
    %c0_18 = arith.constant 0 : index
    %c0_19 = arith.constant 0 : index
    %22 = vector.load %arg8[%c0_18, %c0_19] : memref<64x32xf32, #tpu.memory_space<vmem>>, vector<64x32xf32>
    %cst_20 = arith.constant dense<0.000000e+00> : vector<8x32xf32>
    %23 = tpu.matmul %21, %22, %cst_20 {dimension_numbers = #tpu.dot_dimension_numbers<[1], [0], [0], [1], [0, 0, 1, 1], [], []>} : vector<8x64xf32>, vector<64x32xf32>, vector<8x32xf32> -> vector<8x32xf32>
    %c0_21 = arith.constant 0 : index
    %c0_22 = arith.constant 0 : index
    %24 = vector.load %arg9[%c0_21, %c0_22] : memref<1x32xf32, #tpu.memory_space<vmem>>, vector<1x32xf32>
    %25 = vector.broadcast %24 : vector<1x32xf32> to vector<8x32xf32>
    %26 = arith.addf %23, %25 : vector<8x32xf32>
    %cst_23 = arith.constant 0.000000e+00 : f32
    %27 = vector.broadcast %cst_23 : f32 to vector<8x32xf32>
    %28 = arith.maximumf %26, %27 : vector<8x32xf32>
    %c0_24 = arith.constant 0 : index
    %c0_25 = arith.constant 0 : index
    %29 = vector.load %arg12[%c0_24, %c0_25] : memref<8x32xf32, #tpu.memory_space<vmem>>, vector<8x32xf32>
    tpu.vector_store %arg12[%c0_24, %c0_25], %28 {strides = array<i32>} : memref<8x32xf32, #tpu.memory_space<vmem>>, vector<8x32xf32>,
    %c0_26 = arith.constant 0 : index
    %c0_27 = arith.constant 0 : index
    %30 = vector.load %arg10[%c0_26, %c0_27] : memref<32x1xf32, #tpu.memory_space<vmem>>, vector<32x1xf32>
    %cst_28 = arith.constant dense<0.000000e+00> : vector<8x1xf32>
    %31 = tpu.matmul %28, %30, %cst_28 {dimension_numbers = #tpu.dot_dimension_numbers<[1], [0], [0], [1], [0, 0, 1, 1], [], []>} : vector<8x32xf32>, vector<32x1xf32>, vector<8x1xf32> -> vector<8x1xf32>
    %c0_29 = arith.constant 0 : index
    %c0_30 = arith.constant 0 : index
    %32 = vector.load %arg11[%c0_29, %c0_30] : memref<1x1xf32, #tpu.memory_space<vmem>>, vector<1x1xf32>
    %33 = vector.broadcast %32 : vector<1x1xf32> to vector<8x1xf32>
    %34 = arith.addf %31, %33 : vector<8x1xf32>
    %c0_31 = arith.constant 0 : index
    %c0_32 = arith.constant 0 : index
    %35 = vector.load %arg13[%c0_31, %c0_32] : memref<8x1xf32, #tpu.memory_space<vmem>>, vector<8x1xf32>
    tpu.vector_store %arg13[%c0_31, %c0_32], %34 {strides = array<i32>} : memref<8x1xf32, #tpu.memory_space<vmem>>, vector<8x1xf32>,
    return
  }
  func.func @transform_0(%arg0: i32) -> (i32, i32) {
    %c0_i32 = arith.constant 0 : i32
    %c0_i32_0 = arith.constant 0 : i32
    return %arg0, %c0_i32 : i32, i32
  }
  func.func @transform_1(%arg0: i32) -> (i32, i32) {
    %c0_i32 = arith.constant 0 : i32
    %c0_i32_0 = arith.constant 0 : i32
    %c0_i32_1 = arith.constant 0 : i32
    return %c0_i32, %c0_i32_0 : i32, i32
  }
  func.func @transform_2(%arg0: i32) -> (i32, i32) {
    %c0_i32 = arith.constant 0 : i32
    %c0_i32_0 = arith.constant 0 : i32
    %c0_i32_1 = arith.constant 0 : i32
    return %c0_i32, %c0_i32_0 : i32, i32
  }
  func.func @transform_3(%arg0: i32) -> (i32, i32) {
    %c0_i32 = arith.constant 0 : i32
    %c0_i32_0 = arith.constant 0 : i32
    %c0_i32_1 = arith.constant 0 : i32
    return %c0_i32, %c0_i32_0 : i32, i32
  }
  func.func @transform_4(%arg0: i32) -> (i32, i32) {
    %c0_i32 = arith.constant 0 : i32
    %c0_i32_0 = arith.constant 0 : i32
    %c0_i32_1 = arith.constant 0 : i32
    return %c0_i32, %c0_i32_0 : i32, i32
  }
  func.func @transform_5(%arg0: i32) -> (i32, i32) {
    %c0_i32 = arith.constant 0 : i32
    %c0_i32_0 = arith.constant 0 : i32
    %c0_i32_1 = arith.constant 0 : i32
    return %c0_i32, %c0_i32_0 : i32, i32
  }
  func.func @transform_6(%arg0: i32) -> (i32, i32) {
    %c0_i32 = arith.constant 0 : i32
    %c0_i32_0 = arith.constant 0 : i32
    %c0_i32_1 = arith.constant 0 : i32
    return %c0_i32, %c0_i32_0 : i32, i32
  }
  func.func @transform_7(%arg0: i32) -> (i32, i32) {
    %c0_i32 = arith.constant 0 : i32
    %c0_i32_0 = arith.constant 0 : i32
    %c0_i32_1 = arith.constant 0 : i32
    return %c0_i32, %c0_i32_0 : i32, i32
  }
  func.func @transform_8(%arg0: i32) -> (i32, i32) {
    %c0_i32 = arith.constant 0 : i32
    %c0_i32_0 = arith.constant 0 : i32
    %c0_i32_1 = arith.constant 0 : i32
    return %c0_i32, %c0_i32_0 : i32, i32
  }
  func.func @transform_9(%arg0: i32) -> (i32, i32) {
    %c0_i32 = arith.constant 0 : i32
    %c0_i32_0 = arith.constant 0 : i32
    %c0_i32_1 = arith.constant 0 : i32
    return %c0_i32, %c0_i32_0 : i32, i32
  }
  func.func @transform_10(%arg0: i32) -> (i32, i32) {
    %c0_i32 = arith.constant 0 : i32
    %c0_i32_0 = arith.constant 0 : i32
    %c0_i32_1 = arith.constant 0 : i32
    return %c0_i32, %c0_i32_0 : i32, i32
  }
  func.func @transform_11(%arg0: i32) -> (i32, i32) {
    %c0_i32 = arith.constant 0 : i32
    %c0_i32_0 = arith.constant 0 : i32
    return %arg0, %c0_i32 : i32, i32
  }
  func.func @transform_12(%arg0: i32) -> (i32, i32) {
    %c0_i32 = arith.constant 0 : i32
    %c0_i32_0 = arith.constant 0 : i32
    return %arg0, %c0_i32 : i32, i32
  }
}

</mosaic_0001>

<llo_original>
// kernel: tpu_custom_call.1
$region0: #{tpu_custom_call.1}
  #allocation0 [shape = 'u32[]', space=smem, size = 0x4, offset = 0x4, fixed_abs, tag = 'smem constant byte address 0x4 - core index']
  #allocation1 [shape = 'u32[144,128]{1,0:T(1,128)}', space=vmem, size = 0x12000, scoped, tag = 'internal scratch']
  #allocation2 [shape = 'f32[1,1]{1,0:T(1,128)S(1)}', space=vmem, size = 0x200, scoped, tag = 'scoped memory for tpu_custom_call.1']
  %s0 = inlined_call_operand.hbm [shape: f32[8,32], index: 0, kind: input, shape index: {}]
  %s1 = inlined_call_operand.hbm [shape: f32[32,64], index: 1, kind: input, shape index: {}]
  %s2 = inlined_call_operand.vmem [shape: f32[1,64], index: 2, kind: input, shape index: {}]
  %s3 = inlined_call_operand.vmem [shape: f32[64,64], index: 3, kind: input, shape index: {}]
  %s4 = inlined_call_operand.vmem [shape: f32[1,64], index: 4, kind: input, shape index: {}]
  %s5 = inlined_call_operand.vmem [shape: f32[64,64], index: 5, kind: input, shape index: {}]
  %s6 = inlined_call_operand.vmem [shape: f32[1,64], index: 6, kind: input, shape index: {}]
  %s7 = inlined_call_operand.vmem [shape: f32[64,32], index: 7, kind: input, shape index: {}]
  %s8 = inlined_call_operand.vmem [shape: f32[1,32], index: 8, kind: input, shape index: {}]
  %s9 = inlined_call_operand.vmem [shape: f32[32,1], index: 9, kind: input, shape index: {}]
  %s10 = inlined_call_operand.<no memory space> [shape: f32[1,1], index: 10, kind: input, shape index: {}]
  %s11 = inlined_call_operand.hbm [shape: f32[8,32], index: 11, kind: output, shape index: {0}]
  %s12 = inlined_call_operand.vmem [shape: f32[8,1], index: 12, kind: output, shape index: {1}]
  %13 = xla_tuple %s11, %s12
  %s14 = sld [smem:[#allocation0]]
  $region70: #{tpu_custom_call.1} parent=0
    _
  %s16 = ssub.s32 1, %s14
  %s17 = scalar_select 0, %s16, %s14
  %v18 = vstv %s10
  %19 = vst [vmem:[#allocation2] sm:$0x1] %v18
  $region1: #{tpu_custom_call.1} parent=0
    #allocation3 [shape = 'u8[4096]{0}', space=vmem, size = 0x1000, scoped, tag = 'input window, operand 0, single buffered']
    #allocation4 [shape = 's32[1]{0}', space=sflag, size = 0x4, scoped, tag = 'scoped memory for tpu_custom_call.1']
    #allocation5 [shape = 's32[1]{0}', space=sflag, size = 0x4, scoped, tag = 'scoped memory for tpu_custom_call.1']
    #allocation6 [shape = 'u8[16384]{0}', space=vmem, size = 0x4000, scoped, tag = 'input window, operand 1, single buffered']
    #allocation7 [shape = 's32[1]{0}', space=sflag, size = 0x4, scoped, tag = 'scoped memory for tpu_custom_call.1']
    #allocation8 [shape = 'u8[4096]{0}', space=vmem, size = 0x1000, scoped, tag = 'output window, operand 0, single buffered']
    %20 = vsyncpa [#allocation4], 0
    %21 = vsyncpa [#allocation7], 0
    %22 = vsyncpa [#allocation5], 0
    // Predicated region
    $region2: #{tpu_custom_call.1} parent=1 // pred_check
      _
    $region3: #{tpu_custom_call.1} parent=1 // pred_check_branch
      %24 = sbr.rel (0) target = $region5
    $region4: #{tpu_custom_call.1} parent=1 // pred_region
      %s26 = ssub.s32 128, 128
      %27 = vsyncadd [#allocation4], %s26
      %s29 = sshll.u32 [#allocation3], 4
      %s30 = int_to_ptr.vmem [resolvable:$true] %s29
      %32 = dma.hbm_to_vmem [thread:$0]  %s0, 128, %s30, [#allocation4]
    $region5: #{tpu_custom_call.1} parent=1 // pred_fallthru
      _
    // Predicated region
    $region6: #{tpu_custom_call.1} parent=1 // pred_check
      _
    $region7: #{tpu_custom_call.1} parent=1 // pred_check_branch
      %34 = sbr.rel (0) target = $region9
    $region8: #{tpu_custom_call.1} parent=1 // pred_region
      %s36 = ssub.s32 512, 512
      %37 = vsyncadd [#allocation7], %s36
      %s38 = sshll.u32 [#allocation6], 4
      %s39 = int_to_ptr.vmem [resolvable:$true] %s38
      %44 = dma.hbm_to_vmem [thread:$0]  %s1, 512, %s39, [#allocation7], 128, 128, 8
    $region9: #{tpu_custom_call.1} parent=1 // pred_fallthru
      _
    // Predicated region
    $region10: #{tpu_custom_call.1} parent=1 // pred_check
      _
    $region11: #{tpu_custom_call.1} parent=1 // pred_check_branch
      %46 = sbr.rel (0) target = $region13
    $region12: #{tpu_custom_call.1} parent=1 // pred_region
      _
    $region13: #{tpu_custom_call.1} parent=1 // pred_fallthru
      _
    // Predicated region
    $region14: #{tpu_custom_call.1} parent=1 // pred_check
      _
    $region15: #{tpu_custom_call.1} parent=1 // pred_check_branch
      %48 = sbr.rel (0) target = $region17
    $region16: #{tpu_custom_call.1} parent=1 // pred_region
      _
    $region17: #{tpu_custom_call.1} parent=1 // pred_fallthru
      _
    // Predicated region
    $region18: #{tpu_custom_call.1} parent=1 // pred_check
      _
    $region19: #{tpu_custom_call.1} parent=1 // pred_check_branch
      %50 = sbr.rel (0) target = $region21
    $region20: #{tpu_custom_call.1} parent=1 // pred_region
      _
    $region21: #{tpu_custom_call.1} parent=1 // pred_fallthru
      _
    // Predicated region
    $region22: #{tpu_custom_call.1} parent=1 // pred_check
      _
    $region23: #{tpu_custom_call.1} parent=1 // pred_check_branch
      %52 = sbr.rel (0) target = $region25
    $region24: #{tpu_custom_call.1} parent=1 // pred_region
      _
    $region25: #{tpu_custom_call.1} parent=1 // pred_fallthru
      _
    // Predicated region
    $region26: #{tpu_custom_call.1} parent=1 // pred_check
      _
    $region27: #{tpu_custom_call.1} parent=1 // pred_check_branch
      %54 = sbr.rel (0) target = $region29
    $region28: #{tpu_custom_call.1} parent=1 // pred_region
      _
    $region29: #{tpu_custom_call.1} parent=1 // pred_fallthru
      _
    // Predicated region
    $region30: #{tpu_custom_call.1} parent=1 // pred_check
      _
    $region31: #{tpu_custom_call.1} parent=1 // pred_check_branch
      %56 = sbr.rel (0) target = $region33
    $region32: #{tpu_custom_call.1} parent=1 // pred_region
      _
    $region33: #{tpu_custom_call.1} parent=1 // pred_fallthru
      _
    // Predicated region
    $region34: #{tpu_custom_call.1} parent=1 // pred_check
      _
    $region35: #{tpu_custom_call.1} parent=1 // pred_check_branch
      %58 = sbr.rel (0) target = $region37
    $region36: #{tpu_custom_call.1} parent=1 // pred_region
      _
    $region37: #{tpu_custom_call.1} parent=1 // pred_fallthru
      _
    // Predicated region
    $region38: #{tpu_custom_call.1} parent=1 // pred_check
      _
    $region39: #{tpu_custom_call.1} parent=1 // pred_check_branch
      %60 = sbr.rel (0) target = $region41
    $region40: #{tpu_custom_call.1} parent=1 // pred_region
      _
    $region41: #{tpu_custom_call.1} parent=1 // pred_fallthru
      _
    // Predicated region
    $region42: #{tpu_custom_call.1} parent=1 // pred_check
      _
    $region43: #{tpu_custom_call.1} parent=1 // pred_check_branch
      %62 = sbr.rel (0) target = $region45
    $region44: #{tpu_custom_call.1} parent=1 // pred_region
      _
    $region45: #{tpu_custom_call.1} parent=1 // pred_fallthru
      _
    // Predicated region
    $region46: #{tpu_custom_call.1} parent=1 // pred_check
      _
    $region47: #{tpu_custom_call.1} parent=1 // pred_check_branch
      %64 = sbr.rel (0) target = $region49
    $region48: #{tpu_custom_call.1} parent=1 // pred_region
      %65 = dma.done [#allocation4], 128
    $region49: #{tpu_custom_call.1} parent=1 // pred_fallthru
      _
    // Predicated region
    $region50: #{tpu_custom_call.1} parent=1 // pred_check
      _
    $region51: #{tpu_custom_call.1} parent=1 // pred_check_branch
      %67 = sbr.rel (0) target = $region53
    $region52: #{tpu_custom_call.1} parent=1 // pred_region
      %68 = dma.done [#allocation7], 512
    $region53: #{tpu_custom_call.1} parent=1 // pred_fallthru
      _
    %v69 = vld [vmem:[#allocation3] sm:$0xff]
    %v70 = vld [vmem:[#allocation6] sm:$0xff]
    %v71 = vld [vmem:[#allocation6 + $0x8] sm:$0xff]
    %v72 = vld [vmem:[#allocation6 + $0x10] sm:$0xff]
    %v73 = vld [vmem:[#allocation6 + $0x18] sm:$0xff]
    %v74 = vld [vmem:[%s2] sm:$0x1]
    %v76 = vlaneseq
    %v77 = vshrl.u32 %v76, 7
    %v78 = vsub.s32 0, %v77
    %v79 = vrot.slane %v74, %v78
    %vm81 = vcmask 261120
    %v83 = vsel %vm81, %v69, 0
    %85 = vmatprep.subr.mxu0 0.0
    %86 = vmatpush1.msra.mxu0 0.0
    %87 = vmatprep.subr.mxu0 0.0
    %88 = vmatpush1.msra.mxu0 0.0
    %89 = vmatprep.subr.mxu0 0.0
    %90 = vmatpush1.msra.mxu0 0.0
    %91 = vmatprep.subr.mxu0 0.0
    %92 = vmatpush1.msra.mxu0 0.0
    %93 = vmatprep.subr.mxu0 0.0
    %94 = vmatpush1.msra.mxu0 0.0
    %95 = vmatprep.subr.mxu0 0.0
    %96 = vmatpush1.msra.mxu0 0.0
    %97 = vmatprep.subr.mxu0 0.0
    %98 = vmatpush1.msra.mxu0 0.0
    %99 = vmatprep.subr.mxu0 0.0
    %100 = vmatpush1.msra.mxu0 0.0
    %101 = vmatprep.subr.mxu0 0.0
    %102 = vmatpush1.msra.mxu0 0.0
    %103 = vmatprep.subr.mxu0 0.0
    %104 = vmatpush1.msra.mxu0 0.0
    %105 = vmatprep.subr.mxu0 0.0
    %106 = vmatpush1.msra.mxu0 0.0
    %107 = vmatprep.subr.mxu0 0.0
    %108 = vmatpush1.msra.mxu0 0.0
    %109 = vmatprep.subr.mxu0 0.0
    %110 = vmatpush1.msra.mxu0 %v73
    %111 = vmatprep.subr.mxu0 0.0
    %112 = vmatpush1.msra.mxu0 %v72
    %113 = vmatprep.subr.mxu0 0.0
    %114 = vmatpush1.msra.mxu0 %v71
    %115 = vmatprep.subr.mxu0 0.0
    %116 = vmatpush1.msra.mxu0 %v70
    %117 = vmatprep.subr.mxu0 0.0
    %118 = vmatpush2.msra.mxu0 0.0
    %119 = vmatprep.subr.mxu0 0.0
    %120 = vmatpush2.msra.mxu0 0.0
    %121 = vmatprep.subr.mxu0 0.0
    %122 = vmatpush2.msra.mxu0 0.0
    %123 = vmatprep.subr.mxu0 0.0
    %124 = vmatpush2.msra.mxu0 0.0
    %125 = vmatprep.subr.mxu0 0.0
    %126 = vmatpush2.msra.mxu0 0.0
    %127 = vmatprep.subr.mxu0 0.0
    %128 = vmatpush2.msra.mxu0 0.0
    %129 = vmatprep.subr.mxu0 0.0
    %130 = vmatpush2.msra.mxu0 0.0
    %131 = vmatprep.subr.mxu0 0.0
    %132 = vmatpush2.msra.mxu0 0.0
    %133 = vmatprep.subr.mxu0 0.0
    %134 = vmatpush2.msra.mxu0 0.0
    %135 = vmatprep.subr.mxu0 0.0
    %136 = vmatpush2.msra.mxu0 0.0
    %137 = vmatprep.subr.mxu0 0.0
    %138 = vmatpush2.msra.mxu0 0.0
    %139 = vmatprep.subr.mxu0 0.0
    %140 = vmatpush2.msra.mxu0 0.0
    %141 = vmatprep.subr.mxu0 0.0
    %142 = vmatpush2.msra.mxu0 0.0
    %143 = vmatprep.subr.mxu0 0.0
    %144 = vmatpush2.msra.mxu0 0.0
    %145 = vmatprep.subr.mxu0 0.0
    %146 = vmatpush2.msra.mxu0 0.0
    %147 = vmatprep.subr.mxu0 0.0
    %148 = vmatpush2.msra.mxu0 0.0
    %149 = vmatprep.mubr.f32.mxu0 0.0
    %150 = vmatmul.mubr.f32.gmra.mxu0 %v83
    %v151 = vpop.f32.mrf.mxu0
    %v152 = vadd.f32 %v79, %v151
    %v153 = vpop.f32.mrf.mxu0
    %154 = vdwg.mxu0
    %v155 = vmax.f32 %v152, 0.0
    %v156 = vld [vmem:[%s3] sm:$0xff]
    %v157 = vld [vmem:[%s3 + $0x8] sm:$0xff]
    %v158 = vld [vmem:[%s3 + $0x10] sm:$0xff]
    %v159 = vld [vmem:[%s3 + $0x18] sm:$0xff]
    %v160 = vld [vmem:[%s3 + $0x20] sm:$0xff]
    %v161 = vld [vmem:[%s3 + $0x28] sm:$0xff]
    %v162 = vld [vmem:[%s3 + $0x30] sm:$0xff]
    %v163 = vld [vmem:[%s3 + $0x38] sm:$0xff]
    %v164 = vld [vmem:[%s4] sm:$0x1]
    %v166 = vlaneseq
    %v167 = vshrl.u32 %v166, 7
    %v168 = vsub.s32 0, %v167
    %v169 = vrot.slane %v164, %v168
    %vm171 = vcmask 523264
    %v173 = vsel %vm171, %v155, 0
    %175 = vmatprep.subr.mxu0 0.0
    %176 = vmatpush1.msra.mxu0 0.0
    %177 = vmatprep.subr.mxu0 0.0
    %178 = vmatpush1.msra.mxu0 0.0
    %179 = vmatprep.subr.mxu0 0.0
    %180 = vmatpush1.msra.mxu0 0.0
    %181 = vmatprep.subr.mxu0 0.0
    %182 = vmatpush1.msra.mxu0 0.0
    %183 = vmatprep.subr.mxu0 0.0
    %184 = vmatpush1.msra.mxu0 0.0
    %185 = vmatprep.subr.mxu0 0.0
    %186 = vmatpush1.msra.mxu0 0.0
    %187 = vmatprep.subr.mxu0 0.0
    %188 = vmatpush1.msra.mxu0 0.0
    %189 = vmatprep.subr.mxu0 0.0
    %190 = vmatpush1.msra.mxu0 0.0
    %191 = vmatprep.subr.mxu0 0.0
    %192 = vmatpush1.msra.mxu0 %v163
    %193 = vmatprep.subr.mxu0 0.0
    %194 = vmatpush1.msra.mxu0 %v162
    %195 = vmatprep.subr.mxu0 0.0
    %196 = vmatpush1.msra.mxu0 %v161
    %197 = vmatprep.subr.mxu0 0.0
    %198 = vmatpush1.msra.mxu0 %v160
    %199 = vmatprep.subr.mxu0 0.0
    %200 = vmatpush1.msra.mxu0 %v159
    %201 = vmatprep.subr.mxu0 0.0
    %202 = vmatpush1.msra.mxu0 %v158
    %203 = vmatprep.subr.mxu0 0.0
    %204 = vmatpush1.msra.mxu0 %v157
    %205 = vmatprep.subr.mxu0 0.0
    %206 = vmatpush1.msra.mxu0 %v156
    %207 = vmatprep.subr.mxu0 0.0
    %208 = vmatpush2.msra.mxu0 0.0
    %209 = vmatprep.subr.mxu0 0.0
    %210 = vmatpush2.msra.mxu0 0.0
    %211 = vmatprep.subr.mxu0 0.0
    %212 = vmatpush2.msra.mxu0 0.0
    %213 = vmatprep.subr.mxu0 0.0
    %214 = vmatpush2.msra.mxu0 0.0
    %215 = vmatprep.subr.mxu0 0.0
    %216 = vmatpush2.msra.mxu0 0.0
    %217 = vmatprep.subr.mxu0 0.0
    %218 = vmatpush2.msra.mxu0 0.0
    %219 = vmatprep.subr.mxu0 0.0
    %220 = vmatpush2.msra.mxu0 0.0
    %221 = vmatprep.subr.mxu0 0.0
    %222 = vmatpush2.msra.mxu0 0.0
    %223 = vmatprep.subr.mxu0 0.0
    %224 = vmatpush2.msra.mxu0 0.0
    %225 = vmatprep.subr.mxu0 0.0
    %226 = vmatpush2.msra.mxu0 0.0
    %227 = vmatprep.subr.mxu0 0.0
    %228 = vmatpush2.msra.mxu0 0.0
    %229 = vmatprep.subr.mxu0 0.0
    %230 = vmatpush2.msra.mxu0 0.0
    %231 = vmatprep.subr.mxu0 0.0
    %232 = vmatpush2.msra.mxu0 0.0
    %233 = vmatprep.subr.mxu0 0.0
    %234 = vmatpush2.msra.mxu0 0.0
    %235 = vmatprep.subr.mxu0 0.0
    %236 = vmatpush2.msra.mxu0 0.0
    %237 = vmatprep.subr.mxu0 0.0
    %238 = vmatpush2.msra.mxu0 0.0
    %239 = vmatprep.mubr.f32.mxu0 0.0
    %240 = vmatmul.mubr.f32.gmra.mxu0 %v173
    %v241 = vpop.f32.mrf.mxu0
    %v242 = vadd.f32 %v169, %v241
    %v243 = vpop.f32.mrf.mxu0
    %244 = vdwg.mxu0
    %v245 = vmax.f32 %v242, 0.0
    %v246 = vld [vmem:[%s5] sm:$0xff]
    %v247 = vld [vmem:[%s5 + $0x8] sm:$0xff]
    %v248 = vld [vmem:[%s5 + $0x10] sm:$0xff]
    %v249 = vld [vmem:[%s5 + $0x18] sm:$0xff]
    %v250 = vld [vmem:[%s5 + $0x20] sm:$0xff]
    %v251 = vld [vmem:[%s5 + $0x28] sm:$0xff]
    %v252 = vld [vmem:[%s5 + $0x30] sm:$0xff]
    %v253 = vld [vmem:[%s5 + $0x38] sm:$0xff]
    %v254 = vld [vmem:[%s6] sm:$0x1]
    %v256 = vlaneseq
    %v257 = vshrl.u32 %v256, 7
    %v258 = vsub.s32 0, %v257
    %v259 = vrot.slane %v254, %v258
    %v262 = vsel %vm171, %v245, 0
    %264 = vmatprep.subr.mxu0 0.0
    %265 = vmatpush1.msra.mxu0 0.0
    %266 = vmatprep.subr.mxu0 0.0
    %267 = vmatpush1.msra.mxu0 0.0
    %268 = vmatprep.subr.mxu0 0.0
    %269 = vmatpush1.msra.mxu0 0.0
    %270 = vmatprep.subr.mxu0 0.0
    %271 = vmatpush1.msra.mxu0 0.0
    %272 = vmatprep.subr.mxu0 0.0
    %273 = vmatpush1.msra.mxu0 0.0
    %274 = vmatprep.subr.mxu0 0.0
    %275 = vmatpush1.msra.mxu0 0.0
    %276 = vmatprep.subr.mxu0 0.0
    %277 = vmatpush1.msra.mxu0 0.0
    %278 = vmatprep.subr.mxu0 0.0
    %279 = vmatpush1.msra.mxu0 0.0
    %280 = vmatprep.subr.mxu0 0.0
    %281 = vmatpush1.msra.mxu0 %v253
    %282 = vmatprep.subr.mxu0 0.0
    %283 = vmatpush1.msra.mxu0 %v252
    %284 = vmatprep.subr.mxu0 0.0
    %285 = vmatpush1.msra.mxu0 %v251
    %286 = vmatprep.subr.mxu0 0.0
    %287 = vmatpush1.msra.mxu0 %v250
    %288 = vmatprep.subr.mxu0 0.0
    %289 = vmatpush1.msra.mxu0 %v249
    %290 = vmatprep.subr.mxu0 0.0
    %291 = vmatpush1.msra.mxu0 %v248
    %292 = vmatprep.subr.mxu0 0.0
    %293 = vmatpush1.msra.mxu0 %v247
    %294 = vmatprep.subr.mxu0 0.0
    %295 = vmatpush1.msra.mxu0 %v246
    %296 = vmatprep.subr.mxu0 0.0
    %297 = vmatpush2.msra.mxu0 0.0
    %298 = vmatprep.subr.mxu0 0.0
    %299 = vmatpush2.msra.mxu0 0.0
    %300 = vmatprep.subr.mxu0 0.0
    %301 = vmatpush2.msra.mxu0 0.0
    %302 = vmatprep.subr.mxu0 0.0
    %303 = vmatpush2.msra.mxu0 0.0
    %304 = vmatprep.subr.mxu0 0.0
    %305 = vmatpush2.msra.mxu0 0.0
    %306 = vmatprep.subr.mxu0 0.0
    %307 = vmatpush2.msra.mxu0 0.0
    %308 = vmatprep.subr.mxu0 0.0
    %309 = vmatpush2.msra.mxu0 0.0
    %310 = vmatprep.subr.mxu0 0.0
    %311 = vmatpush2.msra.mxu0 0.0
    %312 = vmatprep.subr.mxu0 0.0
    %313 = vmatpush2.msra.mxu0 0.0
    %314 = vmatprep.subr.mxu0 0.0
    %315 = vmatpush2.msra.mxu0 0.0
    %316 = vmatprep.subr.mxu0 0.0
    %317 = vmatpush2.msra.mxu0 0.0
    %318 = vmatprep.subr.mxu0 0.0
    %319 = vmatpush2.msra.mxu0 0.0
    %320 = vmatprep.subr.mxu0 0.0
    %321 = vmatpush2.msra.mxu0 0.0
    %322 = vmatprep.subr.mxu0 0.0
    %323 = vmatpush2.msra.mxu0 0.0
    %324 = vmatprep.subr.mxu0 0.0
    %325 = vmatpush2.msra.mxu0 0.0
    %326 = vmatprep.subr.mxu0 0.0
    %327 = vmatpush2.msra.mxu0 0.0
    %328 = vmatprep.mubr.f32.mxu0 0.0
    %329 = vmatmul.mubr.f32.gmra.mxu0 %v262
    %v330 = vpop.f32.mrf.mxu0
    %v331 = vadd.f32 %v259, %v330
    %v332 = vpop.f32.mrf.mxu0
    %333 = vdwg.mxu0
    %v334 = vmax.f32 %v331, 0.0
    %v335 = vld [vmem:[%s7] sm:$0xff]
    %v336 = vld [vmem:[%s7 + $0x8] sm:$0xff]
    %v337 = vld [vmem:[%s7 + $0x10] sm:$0xff]
    %v338 = vld [vmem:[%s7 + $0x18] sm:$0xff]
    %v339 = vld [vmem:[%s7 + $0x20] sm:$0xff]
    %v340 = vld [vmem:[%s7 + $0x28] sm:$0xff]
    %v341 = vld [vmem:[%s7 + $0x30] sm:$0xff]
    %v342 = vld [vmem:[%s7 + $0x38] sm:$0xff]
    %v343 = vld [vmem:[%s8] sm:$0x1]
    %v345 = vlaneseq
    %v346 = vshrl.u32 %v345, 7
    %v347 = vsub.s32 0, %v346
    %v348 = vrot.slane %v343, %v347
    %v351 = vsel %vm171, %v334, 0
    %353 = vmatprep.subr.mxu0 0.0
    %354 = vmatpush1.msra.mxu0 0.0
    %355 = vmatprep.subr.mxu0 0.0
    %356 = vmatpush1.msra.mxu0 0.0
    %357 = vmatprep.subr.mxu0 0.0
    %358 = vmatpush1.msra.mxu0 0.0
    %359 = vmatprep.subr.mxu0 0.0
    %360 = vmatpush1.msra.mxu0 0.0
    %361 = vmatprep.subr.mxu0 0.0
    %362 = vmatpush1.msra.mxu0 0.0
    %363 = vmatprep.subr.mxu0 0.0
    %364 = vmatpush1.msra.mxu0 0.0
    %365 = vmatprep.subr.mxu0 0.0
    %366 = vmatpush1.msra.mxu0 0.0
    %367 = vmatprep.subr.mxu0 0.0
    %368 = vmatpush1.msra.mxu0 0.0
    %369 = vmatprep.subr.mxu0 0.0
    %370 = vmatpush1.msra.mxu0 %v342
    %371 = vmatprep.subr.mxu0 0.0
    %372 = vmatpush1.msra.mxu0 %v341
    %373 = vmatprep.subr.mxu0 0.0
    %374 = vmatpush1.msra.mxu0 %v340
    %375 = vmatprep.subr.mxu0 0.0
    %376 = vmatpush1.msra.mxu0 %v339
    %377 = vmatprep.subr.mxu0 0.0
    %378 = vmatpush1.msra.mxu0 %v338
    %379 = vmatprep.subr.mxu0 0.0
    %380 = vmatpush1.msra.mxu0 %v337
    %381 = vmatprep.subr.mxu0 0.0
    %382 = vmatpush1.msra.mxu0 %v336
    %383 = vmatprep.subr.mxu0 0.0
    %384 = vmatpush1.msra.mxu0 %v335
    %385 = vmatprep.subr.mxu0 0.0
    %386 = vmatpush2.msra.mxu0 0.0
    %387 = vmatprep.subr.mxu0 0.0
    %388 = vmatpush2.msra.mxu0 0.0
    %389 = vmatprep.subr.mxu0 0.0
    %390 = vmatpush2.msra.mxu0 0.0
    %391 = vmatprep.subr.mxu0 0.0
    %392 = vmatpush2.msra.mxu0 0.0
    %393 = vmatprep.subr.mxu0 0.0
    %394 = vmatpush2.msra.mxu0 0.0
    %395 = vmatprep.subr.mxu0 0.0
    %396 = vmatpush2.msra.mxu0 0.0
    %397 = vmatprep.subr.mxu0 0.0
    %398 = vmatpush2.msra.mxu0 0.0
    %399 = vmatprep.subr.mxu0 0.0
    %400 = vmatpush2.msra.mxu0 0.0
    %401 = vmatprep.subr.mxu0 0.0
    %402 = vmatpush2.msra.mxu0 0.0
    %403 = vmatprep.subr.mxu0 0.0
    %404 = vmatpush2.msra.mxu0 0.0
    %405 = vmatprep.subr.mxu0 0.0
    %406 = vmatpush2.msra.mxu0 0.0
    %407 = vmatprep.subr.mxu0 0.0
    %408 = vmatpush2.msra.mxu0 0.0
    %409 = vmatprep.subr.mxu0 0.0
    %410 = vmatpush2.msra.mxu0 0.0
    %411 = vmatprep.subr.mxu0 0.0
    %412 = vmatpush2.msra.mxu0 0.0
    %413 = vmatprep.subr.mxu0 0.0
    %414 = vmatpush2.msra.mxu0 0.0
    %415 = vmatprep.subr.mxu0 0.0
    %416 = vmatpush2.msra.mxu0 0.0
    %417 = vmatprep.mubr.f32.mxu0 0.0
    %418 = vmatmul.mubr.f32.gmra.mxu0 %v351
    %v419 = vpop.f32.mrf.mxu0
    %v420 = vadd.f32 %v348, %v419
    %v421 = vpop.f32.mrf.mxu0
    %422 = vdwg.mxu0
    %v423 = vmax.f32 %v420, 0.0
    %424 = vst.msk [vmem:[#allocation8] sm:$0xff] %vm81, %v423
    %v425 = vld [vmem:[%s9] sm:$0xff]
    %v426 = vld [vmem:[%s9 + $0x8] sm:$0xff]
    %v427 = vld [vmem:[%s9 + $0x10] sm:$0xff]
    %v428 = vld [vmem:[%s9 + $0x18] sm:$0xff]
    %v429 = vld [vmem:[#allocation2] sm:$0x1]
    %v431 = vlaneseq
    %v432 = vshrl.u32 %v431, 7
    %v433 = vsub.s32 0, %v432
    %v434 = vrot.slane %v429, %v433
    %v437 = vsel %vm81, %v423, 0
    %439 = vmatprep.subr.mxu0 0.0
    %440 = vmatpush1.msra.mxu0 0.0
    %441 = vmatprep.subr.mxu0 0.0
    %442 = vmatpush1.msra.mxu0 0.0
    %443 = vmatprep.subr.mxu0 0.0
    %444 = vmatpush1.msra.mxu0 0.0
    %445 = vmatprep.subr.mxu0 0.0
    %446 = vmatpush1.msra.mxu0 0.0
    %447 = vmatprep.subr.mxu0 0.0
    %448 = vmatpush1.msra.mxu0 0.0
    %449 = vmatprep.subr.mxu0 0.0
    %450 = vmatpush1.msra.mxu0 0.0
    %451 = vmatprep.subr.mxu0 0.0
    %452 = vmatpush1.msra.mxu0 0.0
    %453 = vmatprep.subr.mxu0 0.0
    %454 = vmatpush1.msra.mxu0 0.0
    %455 = vmatprep.subr.mxu0 0.0
    %456 = vmatpush1.msra.mxu0 0.0
    %457 = vmatprep.subr.mxu0 0.0
    %458 = vmatpush1.msra.mxu0 0.0
    %459 = vmatprep.subr.mxu0 0.0
    %460 = vmatpush1.msra.mxu0 0.0
    %461 = vmatprep.subr.mxu0 0.0
    %462 = vmatpush1.msra.mxu0 0.0
    %463 = vmatprep.subr.mxu0 0.0
    %464 = vmatpush1.msra.mxu0 %v428
    %465 = vmatprep.subr.mxu0 0.0
    %466 = vmatpush1.msra.mxu0 %v427
    %467 = vmatprep.subr.mxu0 0.0
    %468 = vmatpush1.msra.mxu0 %v426
    %469 = vmatprep.subr.mxu0 0.0
    %470 = vmatpush1.msra.mxu0 %v425
    %471 = vmatprep.subr.mxu0 0.0
    %472 = vmatpush2.msra.mxu0 0.0
    %473 = vmatprep.subr.mxu0 0.0
    %474 = vmatpush2.msra.mxu0 0.0
    %475 = vmatprep.subr.mxu0 0.0
    %476 = vmatpush2.msra.mxu0 0.0
    %477 = vmatprep.subr.mxu0 0.0
    %478 = vmatpush2.msra.mxu0 0.0
    %479 = vmatprep.subr.mxu0 0.0
    %480 = vmatpush2.msra.mxu0 0.0
    %481 = vmatprep.subr.mxu0 0.0
    %482 = vmatpush2.msra.mxu0 0.0
    %483 = vmatprep.subr.mxu0 0.0
    %484 = vmatpush2.msra.mxu0 0.0
    %485 = vmatprep.subr.mxu0 0.0
    %486 = vmatpush2.msra.mxu0 0.0
    %487 = vmatprep.subr.mxu0 0.0
    %488 = vmatpush2.msra.mxu0 0.0
    %489 = vmatprep.subr.mxu0 0.0
    %490 = vmatpush2.msra.mxu0 0.0
    %491 = vmatprep.subr.mxu0 0.0
    %492 = vmatpush2.msra.mxu0 0.0
    %493 = vmatprep.subr.mxu0 0.0
    %494 = vmatpush2.msra.mxu0 0.0
    %495 = vmatprep.subr.mxu0 0.0
    %496 = vmatpush2.msra.mxu0 0.0
    %497 = vmatprep.subr.mxu0 0.0
    %498 = vmatpush2.msra.mxu0 0.0
    %499 = vmatprep.subr.mxu0 0.0
    %500 = vmatpush2.msra.mxu0 0.0
    %501 = vmatprep.subr.mxu0 0.0
    %502 = vmatpush2.msra.mxu0 0.0
    %503 = vmatprep.mubr.f32.mxu0 0.0
    %504 = vmatmul.mubr.f32.gmra.mxu0 %v437
    %v505 = vpop.f32.mrf.mxu0
    %v506 = vadd.f32 %v434, %v505
    %v507 = vpop.f32.mrf.mxu0
    %508 = vdwg.mxu0
    %vm509 = vcmask 7168
    %510 = vst.msk [vmem:[%s12] sm:$0xff] %vm509, %v506
    // Predicated region
    $region54: #{tpu_custom_call.1} parent=1 // pred_check
      _
    $region55: #{tpu_custom_call.1} parent=1 // pred_check_branch
      %512 = sbr.rel (0) target = $region57
    $region56: #{tpu_custom_call.1} parent=1 // pred_region
      %s514 = ssub.s32 128, 128
      %515 = vsyncadd [#allocation5], %s514
      %s517 = sshll.u32 [#allocation8], 4
      %s518 = int_to_ptr.vmem [resolvable:$true] %s517
      %520 = dma.vmem_to_hbm [thread:$0]  %s518, 128, %s11, [#allocation5]
    $region57: #{tpu_custom_call.1} parent=1 // pred_fallthru
      _
    // Predicated region
    $region58: #{tpu_custom_call.1} parent=1 // pred_check
      _
    $region59: #{tpu_custom_call.1} parent=1 // pred_check_branch
      %522 = sbr.rel (0) target = $region61
    $region60: #{tpu_custom_call.1} parent=1 // pred_region
      _
    $region61: #{tpu_custom_call.1} parent=1 // pred_fallthru
      _
    // Predicated region
    $region62: #{tpu_custom_call.1} parent=1 // pred_check
      _
    $region63: #{tpu_custom_call.1} parent=1 // pred_check_branch
      %524 = sbr.rel (0) target = $region65
    $region64: #{tpu_custom_call.1} parent=1 // pred_region
      %525 = dma.done [#allocation5], 128
    $region65: #{tpu_custom_call.1} parent=1 // pred_fallthru
      _
    // Predicated region
    $region66: #{tpu_custom_call.1} parent=1 // pred_check
      _
    $region67: #{tpu_custom_call.1} parent=1 // pred_check_branch
      %527 = sbr.rel (0) target = $region69
    $region68: #{tpu_custom_call.1} parent=1 // pred_region
      _
    $region69: #{tpu_custom_call.1} parent=1 // pred_fallthru
      _
    %528 = vsyncpa [#allocation4], 1
    %529 = vsyncpa [#allocation7], 1
    %530 = vsyncpa [#allocation5], 1

</llo_original>
